<compile_context>
chip_gen: v6e
topology: v6e:2x2x1
jax: 0.10.0
libtpu: 0.0.40
codegen_flags: <defaults>
</compile_context>

<pallas_src>
import jax
import jax.numpy as jnp
from jax.experimental import pallas as pl
from jax.experimental.pallas import tpu as pltpu

N_CLASSES = 6
N_OUT_PAD = 8      # fc_3 output padded 6 -> 8 (narrow, last dim == full array dim)
H1 = 256           # fc_1 output width
H2_PAD = 128       # fc_2 output padded 32 -> 128 (lane-dense h2)


def _round_up(n, m):
    return -(-n // m) * m


def mlp_kernel(x_ref, w1_ref, b1_ref, w2_ref, b2_ref, w3_ref, b3_ref, o_ref):
    # in-kernel bf16 cast of the f32 x tile (no separate wrapper-side convert pass)
    x = x_ref[...].astype(jnp.bfloat16)
    # fc_1 + relu  (bf16 operands, f32 accumulation)
    h1 = jnp.dot(x, w1_ref[...], preferred_element_type=jnp.float32)
    h1 = jnp.maximum(h1 + b1_ref[...], 0.0).astype(jnp.bfloat16)
    # fc_2 + relu  (output padded to 128 lanes; padded cols are exactly 0)
    h2 = jnp.dot(h1, w2_ref[...], preferred_element_type=jnp.float32)
    h2 = jnp.maximum(h2 + b2_ref[...], 0.0).astype(jnp.bfloat16)
    # fc_3 (logits, no activation) -- narrow 8-wide output
    h3 = jnp.dot(h2, w3_ref[...], preferred_element_type=jnp.float32)
    o_ref[...] = (h3 + b3_ref[...]).astype(o_ref.dtype)


def classification_net(x, params, *, tb_cap=2048, vmem_budget_bytes=36 << 20):
    """x: (B, D) float32.  params: dict of w1,b1,w2,b2,w3,b3 (w2/w3/b2/b3 padded).

    Returns (B, 6) float32 logits, matching PyTorch ClassificationNet.forward
    (up to the deliberate bf16 operand cast with f32 accumulation).
    """
    w1, b1, w2, b2, w3, b3 = (params[k] for k in ("w1", "b1", "w2", "b2", "w3", "b3"))
    B, D = x.shape

    # --- batch tile from a VMEM budget -------------------------------------
    # Per row of a tile (bytes): 2x double-buffered f32 x tile, 2x double-buffered
    # f32 out tile, h1 (f32 + bf16 copy), h2 (f32 + bf16 copy), h3 (f32).
    bytes_per_row = (
        2 * D * 4
        + 2 * N_OUT_PAD * 4
        + H1 * (4 + 2)
        + H2_PAD * (4 + 2)
        + N_OUT_PAD * 4
    )
    tb_budget = max(8, (vmem_budget_bytes // bytes_per_row) // 8 * 8)
    TB = min(tb_cap, tb_budget, _round_up(B, 8))
    # keep at least 2 grid steps for large batches (feeds both TCs on megacore parts)
    if B > 1024 and pl.cdiv(B, TB) < 2:
        TB = _round_up(pl.cdiv(B, 2), 8)
    num_tiles = pl.cdiv(B, TB)  # ragged last tile is fine: no cross-row reduction

    # --- bf16 weights (tiny one-time cast; halves resident weight VMEM) -----
    w1_bf = w1.astype(jnp.bfloat16)
    w2_bf = w2.astype(jnp.bfloat16)
    w3_bf = w3.astype(jnp.bfloat16)

    const = lambda shape: pl.BlockSpec(shape, lambda *_: (0,) * len(shape))

    flops = 2 * B * (D * H1 + H1 * H2_PAD + H2_PAD * N_OUT_PAD)
    bytes_accessed = (
        B * D * 4
        + (w1_bf.size + w2_bf.size + w3_bf.size) * 2
        + (b1.size + b2.size + b3.size) * 4
        + B * N_OUT_PAD * 4
    )

    out = pl.pallas_call(
        mlp_kernel,
        out_shape=jax.ShapeDtypeStruct((B, N_OUT_PAD), jnp.float32),
        grid_spec=pl.GridSpec(
            grid=(num_tiles,),
            in_specs=[
                # batch-tiled f32 activation: walks the batch axis with the grid
                pl.BlockSpec((TB, D), lambda i: (i, 0)),
                # weights / biases: full blocks, constant index -> VMEM-resident
                const(w1_bf.shape), const(b1.shape),
                const(w2_bf.shape), const(b2.shape),
                const(w3_bf.shape), const(b3.shape),
            ],
            out_specs=pl.BlockSpec((TB, N_OUT_PAD), lambda i: (i, 0)),
        ),
        compiler_params=pltpu.CompilerParams(
            dimension_semantics=("parallel",),
            vmem_limit_bytes=48 << 20,  # above the 16/32 MiB defaults, under v7x 64 MiB
        ),
        cost_estimate=pl.CostEstimate(
            flops=flops, transcendentals=0, bytes_accessed=bytes_accessed
        ),
    )(x, w1_bf, b1, w2_bf, b2, w3_bf, b3)

    # strip the 2 padding classes (rows past B were never written)
    return out[:, :N_CLASSES]


def init_params(key, dimension):
    """PyTorch-Linear-style init (weights stored transposed: (in, out)).

    fc_2 is zero-padded 32 -> 128 output lanes, fc_3 correspondingly has zero
    input rows 32..127 and is padded 6 -> 8 output lanes; the padding is exact
    (zeros through ReLU) so the 6 real logits are unchanged.
    """
    ks = jax.random.split(key, 6)

    def linear(kw, kb, fan_in, fan_out):
        bound = 1.0 / jnp.sqrt(fan_in)
        w = jax.random.uniform(kw, (fan_in, fan_out), jnp.float32, -bound, bound)
        b = jax.random.uniform(kb, (1, fan_out), jnp.float32, -bound, bound)
        return w, b

    w1, b1 = linear(ks[0], ks[1], dimension, H1)
    w2, b2 = linear(ks[2], ks[3], H1, 32)
    w3, b3 = linear(ks[4], ks[5], 32, N_CLASSES)

    w2p = jnp.zeros((H1, H2_PAD), jnp.float32).at[:, :32].set(w2)
    b2p = jnp.zeros((1, H2_PAD), jnp.float32).at[:, :32].set(b2)
    w3p = jnp.zeros((H2_PAD, N_OUT_PAD), jnp.float32).at[:32, :N_CLASSES].set(w3)
    b3p = jnp.zeros((1, N_OUT_PAD), jnp.float32).at[:, :N_CLASSES].set(b3)
    return {"w1": w1, "b1": b1, "w2": w2p, "b2": b2p, "w3": w3p, "b3": b3p}


if __name__ == "__main__":
    key = jax.random.PRNGKey(0)
    k_x, k_p = jax.random.split(key)

    batch, dimension = 8, 64
    x = jax.random.normal(k_x, (batch, dimension), jnp.float32)
    params = init_params(k_p, dimension)

    out = classification_net(x, params)
    jax.block_until_ready(out)
    assert out.shape == (batch, N_CLASSES)

    # Reference 1: emulate the kernel's numerics (bf16 operands, f32 accumulation).
    f32 = jnp.float32
    xb = x.astype(jnp.bfloat16).astype(f32)
    w1b = params["w1"].astype(jnp.bfloat16).astype(f32)
    w2b = params["w2"].astype(jnp.bfloat16).astype(f32)
    w3b = params["w3"].astype(jnp.bfloat16).astype(f32)
    h = jnp.maximum(xb @ w1b + params["b1"], 0.0)
    h = jnp.maximum(h.astype(jnp.bfloat16).astype(f32) @ w2b + params["b2"], 0.0)
    ref_bf = (h.astype(jnp.bfloat16).astype(f32) @ w3b + params["b3"])[:, :N_CLASSES]
    assert jnp.allclose(out, ref_bf, atol=2e-3, rtol=2e-3)

    # Reference 2: pure-f32 math (loose tolerance due to deliberate bf16 cast).
    h = jnp.maximum(x @ params["w1"] + params["b1"], 0.0)
    h = jnp.maximum(h @ params["w2"] + params["b2"], 0.0)
    ref_f32 = (h @ params["w3"] + params["b3"])[:, :N_CLASSES]
    assert jnp.allclose(out, ref_f32, atol=1e-1, rtol=1e-1)

    print("KERNEL_OK")
</pallas_src>

<mosaic_0001>
module attributes {stable_mosaic.version = 11 : i64} {
  func.func @mlp_kernel(%arg0: i32, %arg1: memref<8x64xf32, #tpu.memory_space<vmem>>, %arg2: memref<64x256xbf16, #tpu.memory_space<vmem>>, %arg3: memref<1x256xf32, #tpu.memory_space<vmem>>, %arg4: memref<256x128xbf16, #tpu.memory_space<vmem>>, %arg5: memref<1x128xf32, #tpu.memory_space<vmem>>, %arg6: memref<128x8xbf16, #tpu.memory_space<vmem>>, %arg7: memref<1x8xf32, #tpu.memory_space<vmem>>, %arg8: memref<8x8xf32, #tpu.memory_space<vmem>>) attributes {dimension_semantics = [#tpu.dimension_semantics<parallel>], iteration_bounds = array<i64: 1>, scalar_prefetch = 0 : i64, scratch_operands = 0 : i64, tpu.core_type = #tpu.core_type<tc>, window_params = [{transform_indices = @transform_0, window_bounds = array<i64: 8, 64>}, {pipeline_mode = #tpu.pipeline_mode<synchronous>, transform_indices = @transform_1, window_bounds = array<i64: 64, 256>}, {pipeline_mode = #tpu.pipeline_mode<synchronous>, transform_indices = @transform_2, window_bounds = array<i64: 1, 256>}, {pipeline_mode = #tpu.pipeline_mode<synchronous>, transform_indices = @transform_3, window_bounds = array<i64: 256, 128>}, {pipeline_mode = #tpu.pipeline_mode<synchronous>, transform_indices = @transform_4, window_bounds = array<i64: 1, 128>}, {pipeline_mode = #tpu.pipeline_mode<synchronous>, transform_indices = @transform_5, window_bounds = array<i64: 128, 8>}, {pipeline_mode = #tpu.pipeline_mode<synchronous>, transform_indices = @transform_6, window_bounds = array<i64: 1, 8>}, {transform_indices = @transform_7, window_bounds = array<i64: 8, 8>}]} {
    %c0 = arith.constant 0 : index
    %c0_0 = arith.constant 0 : index
    %0 = vector.load %arg1[%c0, %c0_0] : memref<8x64xf32, #tpu.memory_space<vmem>>, vector<8x64xf32>
    %1 = arith.truncf %0 : vector<8x64xf32> to vector<8x64xbf16>
    %c0_1 = arith.constant 0 : index
    %c0_2 = arith.constant 0 : index
    %2 = vector.load %arg2[%c0_1, %c0_2] : memref<64x256xbf16, #tpu.memory_space<vmem>>, vector<64x256xbf16>
    %cst = arith.constant dense<0.000000e+00> : vector<8x256xf32>
    %3 = tpu.matmul %1, %2, %cst {dimension_numbers = #tpu.dot_dimension_numbers<[1], [0], [0], [1], [0, 0, 1, 1], [], []>} : vector<8x64xbf16>, vector<64x256xbf16>, vector<8x256xf32> -> vector<8x256xf32>
    %c0_3 = arith.constant 0 : index
    %c0_4 = arith.constant 0 : index
    %4 = vector.load %arg3[%c0_3, %c0_4] : memref<1x256xf32, #tpu.memory_space<vmem>>, vector<1x256xf32>
    %5 = vector.broadcast %4 : vector<1x256xf32> to vector<8x256xf32>
    %6 = arith.addf %3, %5 : vector<8x256xf32>
    %cst_5 = arith.constant 0.000000e+00 : f32
    %7 = vector.broadcast %cst_5 : f32 to vector<8x256xf32>
    %8 = arith.maximumf %6, %7 : vector<8x256xf32>
    %9 = arith.truncf %8 : vector<8x256xf32> to vector<8x256xbf16>
    %c0_6 = arith.constant 0 : index
    %c0_7 = arith.constant 0 : index
    %10 = vector.load %arg4[%c0_6, %c0_7] : memref<256x128xbf16, #tpu.memory_space<vmem>>, vector<256x128xbf16>
    %cst_8 = arith.constant dense<0.000000e+00> : vector<8x128xf32>
    %11 = tpu.matmul %9, %10, %cst_8 {dimension_numbers = #tpu.dot_dimension_numbers<[1], [0], [0], [1], [0, 0, 1, 1], [], []>} : vector<8x256xbf16>, vector<256x128xbf16>, vector<8x128xf32> -> vector<8x128xf32>
    %c0_9 = arith.constant 0 : index
    %c0_10 = arith.constant 0 : index
    %12 = vector.load %arg5[%c0_9, %c0_10] : memref<1x128xf32, #tpu.memory_space<vmem>>, vector<1x128xf32>
    %13 = vector.broadcast %12 : vector<1x128xf32> to vector<8x128xf32>
    %14 = arith.addf %11, %13 : vector<8x128xf32>
    %cst_11 = arith.constant 0.000000e+00 : f32
    %15 = vector.broadcast %cst_11 : f32 to vector<8x128xf32>
    %16 = arith.maximumf %14, %15 : vector<8x128xf32>
    %17 = arith.truncf %16 : vector<8x128xf32> to vector<8x128xbf16>
    %c0_12 = arith.constant 0 : index
    %c0_13 = arith.constant 0 : index
    %18 = vector.load %arg6[%c0_12, %c0_13] : memref<128x8xbf16, #tpu.memory_space<vmem>>, vector<128x8xbf16>
    %cst_14 = arith.constant dense<0.000000e+00> : vector<8x8xf32>
    %19 = tpu.matmul %17, %18, %cst_14 {dimension_numbers = #tpu.dot_dimension_numbers<[1], [0], [0], [1], [0, 0, 1, 1], [], []>} : vector<8x128xbf16>, vector<128x8xbf16>, vector<8x8xf32> -> vector<8x8xf32>
    %c0_15 = arith.constant 0 : index
    %c0_16 = arith.constant 0 : index
    %20 = vector.load %arg7[%c0_15, %c0_16] : memref<1x8xf32, #tpu.memory_space<vmem>>, vector<1x8xf32>
    %21 = vector.broadcast %20 : vector<1x8xf32> to vector<8x8xf32>
    %22 = arith.addf %19, %21 : vector<8x8xf32>
    %c0_17 = arith.constant 0 : index
    %c0_18 = arith.constant 0 : index
    %23 = vector.load %arg8[%c0_17, %c0_18] : memref<8x8xf32, #tpu.memory_space<vmem>>, vector<8x8xf32>
    tpu.vector_store %arg8[%c0_17, %c0_18], %22 {strides = array<i32>} : memref<8x8xf32, #tpu.memory_space<vmem>>, vector<8x8xf32>,
    return
  }
  func.func @transform_0(%arg0: i32) -> (i32, i32) {
    %c0_i32 = arith.constant 0 : i32
    %c0_i32_0 = arith.constant 0 : i32
    return %arg0, %c0_i32 : i32, i32
  }
  func.func @transform_1(%arg0: i32) -> (i32, i32) {
    %c0_i32 = arith.constant 0 : i32
    %c0_i32_0 = arith.constant 0 : i32
    %c0_i32_1 = arith.constant 0 : i32
    return %c0_i32, %c0_i32_0 : i32, i32
  }
  func.func @transform_2(%arg0: i32) -> (i32, i32) {
    %c0_i32 = arith.constant 0 : i32
    %c0_i32_0 = arith.constant 0 : i32
    %c0_i32_1 = arith.constant 0 : i32
    return %c0_i32, %c0_i32_0 : i32, i32
  }
  func.func @transform_3(%arg0: i32) -> (i32, i32) {
    %c0_i32 = arith.constant 0 : i32
    %c0_i32_0 = arith.constant 0 : i32
    %c0_i32_1 = arith.constant 0 : i32
    return %c0_i32, %c0_i32_0 : i32, i32
  }
  func.func @transform_4(%arg0: i32) -> (i32, i32) {
    %c0_i32 = arith.constant 0 : i32
    %c0_i32_0 = arith.constant 0 : i32
    %c0_i32_1 = arith.constant 0 : i32
    return %c0_i32, %c0_i32_0 : i32, i32
  }
  func.func @transform_5(%arg0: i32) -> (i32, i32) {
    %c0_i32 = arith.constant 0 : i32
    %c0_i32_0 = arith.constant 0 : i32
    %c0_i32_1 = arith.constant 0 : i32
    return %c0_i32, %c0_i32_0 : i32, i32
  }
  func.func @transform_6(%arg0: i32) -> (i32, i32) {
    %c0_i32 = arith.constant 0 : i32
    %c0_i32_0 = arith.constant 0 : i32
    %c0_i32_1 = arith.constant 0 : i32
    return %c0_i32, %c0_i32_0 : i32, i32
  }
  func.func @transform_7(%arg0: i32) -> (i32, i32) {
    %c0_i32 = arith.constant 0 : i32
    %c0_i32_0 = arith.constant 0 : i32
    return %arg0, %c0_i32 : i32, i32
  }
}

</mosaic_0001>

<llo_original>
// kernel: tpu_custom_call.1
$region0: #{tpu_custom_call.1}
  #allocation0 [shape = 'u32[]', space=smem, size = 0x4, offset = 0x4, fixed_abs, tag = 'smem constant byte address 0x4 - core index']
  #allocation1 [shape = 'u32[144,128]{1,0:T(1,128)}', space=vmem, size = 0x12000, scoped, tag = 'internal scratch']
  %s0 = inlined_call_operand.hbm [shape: f32[8,64], index: 0, kind: input, shape index: {}]
  %s1 = inlined_call_operand.vmem [shape: bf16[64,256], index: 1, kind: input, shape index: {}]
  %s2 = inlined_call_operand.vmem [shape: f32[1,256], index: 2, kind: input, shape index: {}]
  %s3 = inlined_call_operand.hbm [shape: bf16[256,128], index: 3, kind: input, shape index: {}]
  %s4 = inlined_call_operand.vmem [shape: f32[1,128], index: 4, kind: input, shape index: {}]
  %s5 = inlined_call_operand.vmem [shape: bf16[128,8], index: 5, kind: input, shape index: {}]
  %s6 = inlined_call_operand.vmem [shape: f32[1,8], index: 6, kind: input, shape index: {}]
  %s7 = inlined_call_operand.hbm [shape: f32[8,8], index: 7, kind: output, shape index: {}]
  %s8 = sld [smem:[#allocation0]]
  $region46: #{tpu_custom_call.1} parent=0
    _
  %s10 = ssub.s32 1, %s8
  %s11 = scalar_select 0, %s10, %s8
  $region1: #{tpu_custom_call.1} parent=0
    #allocation2 [shape = 'u8[4096]{0}', space=vmem, size = 0x1000, scoped, tag = 'input window, operand 0, single buffered']
    #allocation3 [shape = 's32[1]{0}', space=sflag, size = 0x4, scoped, tag = 'scoped memory for tpu_custom_call.1']
    #allocation4 [shape = 's32[1]{0}', space=sflag, size = 0x4, scoped, tag = 'scoped memory for tpu_custom_call.1']
    #allocation5 [shape = 'u8[65536]{0}', space=vmem, size = 0x10000, scoped, tag = 'input window, operand 3, single buffered']
    #allocation6 [shape = 's32[1]{0}', space=sflag, size = 0x4, scoped, tag = 'scoped memory for tpu_custom_call.1']
    #allocation7 [shape = 'u8[4096]{0}', space=vmem, size = 0x1000, scoped, tag = 'output window, operand 0, single buffered']
    %12 = vsyncpa [#allocation3], 0
    %13 = vsyncpa [#allocation6], 0
    %14 = vsyncpa [#allocation4], 0
    // Predicated region
    $region2: #{tpu_custom_call.1} parent=1 // pred_check
      _
    $region3: #{tpu_custom_call.1} parent=1 // pred_check_branch
      %16 = sbr.rel (0) target = $region5
    $region4: #{tpu_custom_call.1} parent=1 // pred_region
      %s18 = ssub.s32 128, 128
      %19 = vsyncadd [#allocation3], %s18
      %s21 = sshll.u32 [#allocation2], 4
      %s22 = int_to_ptr.vmem [resolvable:$true] %s21
      %24 = dma.hbm_to_vmem [thread:$0]  %s0, 128, %s22, [#allocation3]
    $region5: #{tpu_custom_call.1} parent=1 // pred_fallthru
      _
    // Predicated region
    $region6: #{tpu_custom_call.1} parent=1 // pred_check
      _
    $region7: #{tpu_custom_call.1} parent=1 // pred_check_branch
      %26 = sbr.rel (0) target = $region9
    $region8: #{tpu_custom_call.1} parent=1 // pred_region
      _
    $region9: #{tpu_custom_call.1} parent=1 // pred_fallthru
      _
    // Predicated region
    $region10: #{tpu_custom_call.1} parent=1 // pred_check
      _
    $region11: #{tpu_custom_call.1} parent=1 // pred_check_branch
      %28 = sbr.rel (0) target = $region13
    $region12: #{tpu_custom_call.1} parent=1 // pred_region
      _
    $region13: #{tpu_custom_call.1} parent=1 // pred_fallthru
      _
    // Predicated region
    $region14: #{tpu_custom_call.1} parent=1 // pred_check
      _
    $region15: #{tpu_custom_call.1} parent=1 // pred_check_branch
      %30 = sbr.rel (0) target = $region17
    $region16: #{tpu_custom_call.1} parent=1 // pred_region
      %s32 = ssub.s32 2048, 2048
      %33 = vsyncadd [#allocation6], %s32
      %s34 = sshll.u32 [#allocation5], 4
      %s35 = int_to_ptr.vmem [resolvable:$true] %s34
      %40 = dma.hbm_to_vmem [thread:$0]  %s3, 2048, %s35, [#allocation6], 64, 64, 4
    $region17: #{tpu_custom_call.1} parent=1 // pred_fallthru
      _
    // Predicated region
    $region18: #{tpu_custom_call.1} parent=1 // pred_check
      _
    $region19: #{tpu_custom_call.1} parent=1 // pred_check_branch
      %42 = sbr.rel (0) target = $region21
    $region20: #{tpu_custom_call.1} parent=1 // pred_region
      _
    $region21: #{tpu_custom_call.1} parent=1 // pred_fallthru
      _
    // Predicated region
    $region22: #{tpu_custom_call.1} parent=1 // pred_check
      _
    $region23: #{tpu_custom_call.1} parent=1 // pred_check_branch
      %44 = sbr.rel (0) target = $region25
    $region24: #{tpu_custom_call.1} parent=1 // pred_region
      _
    $region25: #{tpu_custom_call.1} parent=1 // pred_fallthru
      _
    // Predicated region
    $region26: #{tpu_custom_call.1} parent=1 // pred_check
      _
    $region27: #{tpu_custom_call.1} parent=1 // pred_check_branch
      %46 = sbr.rel (0) target = $region29
    $region28: #{tpu_custom_call.1} parent=1 // pred_region
      _
    $region29: #{tpu_custom_call.1} parent=1 // pred_fallthru
      _
    // Predicated region
    $region30: #{tpu_custom_call.1} parent=1 // pred_check
      _
    $region31: #{tpu_custom_call.1} parent=1 // pred_check_branch
      %48 = sbr.rel (0) target = $region33
    $region32: #{tpu_custom_call.1} parent=1 // pred_region
      %49 = dma.done [#allocation3], 128
    $region33: #{tpu_custom_call.1} parent=1 // pred_fallthru
      _
    // Predicated region
    $region34: #{tpu_custom_call.1} parent=1 // pred_check
      _
    $region35: #{tpu_custom_call.1} parent=1 // pred_check_branch
      %51 = sbr.rel (0) target = $region37
    $region36: #{tpu_custom_call.1} parent=1 // pred_region
      %52 = dma.done [#allocation6], 2048
    $region37: #{tpu_custom_call.1} parent=1 // pred_fallthru
      _
    %v54 = vld [vmem:[#allocation2] sm:$0xff]
    %v55 = vpack.c.bf16 %v54, %v54
    %v56 = vld [vmem:[%s1] sm:$0xff]
    %v57 = vld [vmem:[%s1 + $0x8] sm:$0xff]
    %v58 = vld [vmem:[%s1 + $0x10] sm:$0xff]
    %v59 = vld [vmem:[%s1 + $0x18] sm:$0xff]
    %v60 = vld [vmem:[%s1 + $0x20] sm:$0xff]
    %v61 = vld [vmem:[%s1 + $0x28] sm:$0xff]
    %v62 = vld [vmem:[%s1 + $0x30] sm:$0xff]
    %v63 = vld [vmem:[%s1 + $0x38] sm:$0xff]
    %v64 = vld [vmem:[%s2] sm:$0x3]
    %v66 = vlaneseq
    %v67 = vshrl.u32 %v66, 7
    %v68 = vsub.s32 0, %v67
    %v69 = vrot.slane %v64, %v68
    %v70 = vlaneseq
    %v71 = vshrl.u32 %v70, 7
    %v72 = vsub.s32 1, %v71
    %v73 = vrot.slane %v64, %v72
    %v84 = vunpack.c.l.b16 %v56
    %v85 = vunpack.c.h.b16 %v56
    %v86 = vunpack.c.l.b16 %v57
    %v87 = vunpack.c.h.b16 %v57
    %v88 = vunpack.c.l.b16 %v58
    %v89 = vunpack.c.h.b16 %v58
    %v90 = vunpack.c.l.b16 %v59
    %v91 = vunpack.c.h.b16 %v59
    %v92 = vunpack.c.l.b16 %v60
    %v93 = vunpack.c.h.b16 %v60
    %v94 = vunpack.c.l.b16 %v61
    %v95 = vunpack.c.h.b16 %v61
    %v96 = vunpack.c.l.b16 %v62
    %v97 = vunpack.c.h.b16 %v62
    %v98 = vunpack.c.l.b16 %v63
    %v99 = vunpack.c.h.b16 %v63
    %v100 = vpack.c.b16 %v86, %v84
    %v101 = vpack.c.b16 %v87, %v85
    %v102 = vpack.c.b16 %v90, %v88
    %v103 = vpack.c.b16 %v91, %v89
    %v104 = vpack.c.b16 %v94, %v92
    %v105 = vpack.c.b16 %v95, %v93
    %v106 = vpack.c.b16 %v98, %v96
    %v107 = vpack.c.b16 %v99, %v97
    %vm116 = vcmask 523264
    %v118 = vsel %vm116, %v55, 0
    %120 = vmatprep.subr.bf16.mxu0 0
    %121 = vmatpush1.bf16.msra.mxu0 0
    %122 = vmatprep.subr.bf16.mxu0 0
    %123 = vmatpush1.bf16.msra.mxu0 0
    %124 = vmatprep.subr.bf16.mxu0 0
    %125 = vmatpush1.bf16.msra.mxu0 0
    %126 = vmatprep.subr.bf16.mxu0 0
    %127 = vmatpush1.bf16.msra.mxu0 0
    %128 = vmatprep.subr.bf16.mxu0 %v107
    %129 = vmatpush1.bf16.msra.mxu0 %v106
    %130 = vmatprep.subr.bf16.mxu0 %v105
    %131 = vmatpush1.bf16.msra.mxu0 %v104
    %132 = vmatprep.subr.bf16.mxu0 %v103
    %133 = vmatpush1.bf16.msra.mxu0 %v102
    %134 = vmatprep.subr.bf16.mxu0 %v101
    %135 = vmatpush1.bf16.msra.mxu0 %v100
    %136 = vmatprep.subr.bf16.mxu0 0
    %137 = vmatpush2.bf16.msra.mxu0 0
    %138 = vmatprep.subr.bf16.mxu0 0
    %139 = vmatpush2.bf16.msra.mxu0 0
    %140 = vmatprep.subr.bf16.mxu0 0
    %141 = vmatpush2.bf16.msra.mxu0 0
    %142 = vmatprep.subr.bf16.mxu0 0
    %143 = vmatpush2.bf16.msra.mxu0 0
    %144 = vmatprep.subr.bf16.mxu0 0
    %145 = vmatpush2.bf16.msra.mxu0 0
    %146 = vmatprep.subr.bf16.mxu0 0
    %147 = vmatpush2.bf16.msra.mxu0 0
    %148 = vmatprep.subr.bf16.mxu0 0
    %149 = vmatpush2.bf16.msra.mxu0 0
    %150 = vmatprep.subr.bf16.mxu0 0
    %151 = vmatpush2.bf16.msra.mxu0 0
    %152 = vmatprep.mubr.bf16.mxu0 0
    %153 = vmatmul.mubr.bf16.gmra.mxu0 %v118
    %v154 = vpop.f32.mrf.mxu0
    %v155 = vadd.f32 %v69, %v154
    %v156 = vpop.f32.mrf.mxu0
    %v157 = vadd.f32 %v73, %v156
    %v158 = vpop.f32.mrf.mxu0
    %v159 = vpop.f32.mrf.mxu0
    %160 = vdwg.mxu0
    %v161 = vmax.f32 %v155, 0.0
    %v162 = vmax.f32 %v157, 0.0
    %v163 = vpack.c.bf16 %v161, %v161
    %v164 = vpack.c.bf16 %v162, %v162
    %v165 = vld [vmem:[#allocation5] sm:$0xf]
    %v166 = vld [vmem:[#allocation5 + $0x4] sm:$0xf]
    %v167 = vld [vmem:[#allocation5 + $0x8] sm:$0xf]
    %v168 = vld [vmem:[#allocation5 + $0xc] sm:$0xf]
    %v169 = vld [vmem:[#allocation5 + $0x10] sm:$0xf]
    %v170 = vld [vmem:[#allocation5 + $0x14] sm:$0xf]
    %v171 = vld [vmem:[#allocation5 + $0x18] sm:$0xf]
    %v172 = vld [vmem:[#allocation5 + $0x1c] sm:$0xf]
    %v173 = vld [vmem:[#allocation5 + $0x20] sm:$0xf]
    %v174 = vld [vmem:[#allocation5 + $0x24] sm:$0xf]
    %v175 = vld [vmem:[#allocation5 + $0x28] sm:$0xf]
    %v176 = vld [vmem:[#allocation5 + $0x2c] sm:$0xf]
    %v177 = vld [vmem:[#allocation5 + $0x30] sm:$0xf]
    %v178 = vld [vmem:[#allocation5 + $0x34] sm:$0xf]
    %v179 = vld [vmem:[#allocation5 + $0x38] sm:$0xf]
    %v180 = vld [vmem:[#allocation5 + $0x3c] sm:$0xf]
    %v181 = vld [vmem:[#allocation5 + $0x40] sm:$0xf]
    %v182 = vld [vmem:[#allocation5 + $0x44] sm:$0xf]
    %v183 = vld [vmem:[#allocation5 + $0x48] sm:$0xf]
    %v184 = vld [vmem:[#allocation5 + $0x4c] sm:$0xf]
    %v185 = vld [vmem:[#allocation5 + $0x50] sm:$0xf]
    %v186 = vld [vmem:[#allocation5 + $0x54] sm:$0xf]
    %v187 = vld [vmem:[#allocation5 + $0x58] sm:$0xf]
    %v188 = vld [vmem:[#allocation5 + $0x5c] sm:$0xf]
    %v189 = vld [vmem:[#allocation5 + $0x60] sm:$0xf]
    %v190 = vld [vmem:[#allocation5 + $0x64] sm:$0xf]
    %v191 = vld [vmem:[#allocation5 + $0x68] sm:$0xf]
    %v192 = vld [vmem:[#allocation5 + $0x6c] sm:$0xf]
    %v193 = vld [vmem:[#allocation5 + $0x70] sm:$0xf]
    %v194 = vld [vmem:[#allocation5 + $0x74] sm:$0xf]
    %v195 = vld [vmem:[#allocation5 + $0x78] sm:$0xf]
    %v196 = vld [vmem:[#allocation5 + $0x7c] sm:$0xf]
    %v197 = vld [vmem:[%s4] sm:$0x1]
    %v199 = vlaneseq
    %v200 = vshrl.u32 %v199, 7
    %v201 = vsub.s32 0, %v200
    %v202 = vrot.slane %v197, %v201
    %v236 = vunpack.c.l.b16 %v165
    %v237 = vunpack.c.l.b16 %v166
    %v238 = vunpack.c.l.b16 %v167
    %v239 = vunpack.c.l.b16 %v168
    %v240 = vunpack.c.l.b16 %v169
    %v241 = vunpack.c.l.b16 %v170
    %v242 = vunpack.c.l.b16 %v171
    %v243 = vunpack.c.l.b16 %v172
    %v244 = vunpack.c.l.b16 %v173
    %v245 = vunpack.c.l.b16 %v174
    %v246 = vunpack.c.l.b16 %v175
    %v247 = vunpack.c.l.b16 %v176
    %v248 = vunpack.c.l.b16 %v177
    %v249 = vunpack.c.l.b16 %v178
    %v250 = vunpack.c.l.b16 %v179
    %v251 = vunpack.c.l.b16 %v180
    %v252 = vunpack.c.l.b16 %v181
    %v253 = vunpack.c.l.b16 %v182
    %v254 = vunpack.c.l.b16 %v183
    %v255 = vunpack.c.l.b16 %v184
    %v256 = vunpack.c.l.b16 %v185
    %v257 = vunpack.c.l.b16 %v186
    %v258 = vunpack.c.l.b16 %v187
    %v259 = vunpack.c.l.b16 %v188
    %v260 = vunpack.c.l.b16 %v189
    %v261 = vunpack.c.l.b16 %v190
    %v262 = vunpack.c.l.b16 %v191
    %v263 = vunpack.c.l.b16 %v192
    %v264 = vunpack.c.l.b16 %v193
    %v265 = vunpack.c.l.b16 %v194
    %v266 = vunpack.c.l.b16 %v195
    %v267 = vunpack.c.l.b16 %v196
    %v268 = vpack.c.b16 %v237, %v236
    %v269 = vpack.c.b16 %v239, %v238
    %v270 = vpack.c.b16 %v241, %v240
    %v271 = vpack.c.b16 %v243, %v242
    %v272 = vpack.c.b16 %v245, %v244
    %v273 = vpack.c.b16 %v247, %v246
    %v274 = vpack.c.b16 %v249, %v248
    %v275 = vpack.c.b16 %v251, %v250
    %v276 = vpack.c.b16 %v253, %v252
    %v277 = vpack.c.b16 %v255, %v254
    %v278 = vpack.c.b16 %v257, %v256
    %v279 = vpack.c.b16 %v259, %v258
    %v280 = vpack.c.b16 %v261, %v260
    %v281 = vpack.c.b16 %v263, %v262
    %v282 = vpack.c.b16 %v265, %v264
    %v283 = vpack.c.b16 %v267, %v266
    %300 = vmatprep.subr.bf16.mxu0 0
    %301 = vmatpush1.bf16.msra.mxu0 %v275
    %302 = vmatprep.subr.bf16.mxu0 0
    %303 = vmatpush1.bf16.msra.mxu0 %v274
    %304 = vmatprep.subr.bf16.mxu0 0
    %305 = vmatpush1.bf16.msra.mxu0 %v273
    %306 = vmatprep.subr.bf16.mxu0 0
    %307 = vmatpush1.bf16.msra.mxu0 %v272
    %308 = vmatprep.subr.bf16.mxu0 0
    %309 = vmatpush1.bf16.msra.mxu0 %v271
    %310 = vmatprep.subr.bf16.mxu0 0
    %311 = vmatpush1.bf16.msra.mxu0 %v270
    %312 = vmatprep.subr.bf16.mxu0 0
    %313 = vmatpush1.bf16.msra.mxu0 %v269
    %314 = vmatprep.subr.bf16.mxu0 0
    %315 = vmatpush1.bf16.msra.mxu0 %v268
    %316 = vmatprep.subr.bf16.mxu0 0
    %317 = vmatpush2.bf16.msra.mxu0 %v283
    %318 = vmatprep.subr.bf16.mxu0 0
    %319 = vmatpush2.bf16.msra.mxu0 %v282
    %320 = vmatprep.subr.bf16.mxu0 0
    %321 = vmatpush2.bf16.msra.mxu0 %v281
    %322 = vmatprep.subr.bf16.mxu0 0
    %323 = vmatpush2.bf16.msra.mxu0 %v280
    %324 = vmatprep.subr.bf16.mxu0 0
    %325 = vmatpush2.bf16.msra.mxu0 %v279
    %326 = vmatprep.subr.bf16.mxu0 0
    %327 = vmatpush2.bf16.msra.mxu0 %v278
    %328 = vmatprep.subr.bf16.mxu0 0
    %329 = vmatpush2.bf16.msra.mxu0 %v277
    %330 = vmatprep.subr.bf16.mxu0 0
    %331 = vmatpush2.bf16.msra.mxu0 %v276
    %332 = vmatprep.mubr.bf16.mxu0 %v164
    %333 = vmatmul.mubr.bf16.gmra.mxu0 %v163
    %v334 = vpop.f32.mrf.mxu0
    %v335 = vadd.f32 %v202, %v334
    %v336 = vpop.f32.mrf.mxu0
    %v337 = vpop.f32.mrf.mxu0
    %v338 = vpop.f32.mrf.mxu0
    %339 = vdwg.mxu0
    %v340 = vmax.f32 %v335, 0.0
    %v341 = vpack.c.bf16 %v340, %v340
    %v342 = vld [vmem:[%s5] sm:$0xf]
    %v343 = vld [vmem:[%s5 + $0x4] sm:$0xf]
    %v344 = vld [vmem:[%s5 + $0x8] sm:$0xf]
    %v345 = vld [vmem:[%s5 + $0xc] sm:$0xf]
    %v346 = vld [vmem:[%s5 + $0x10] sm:$0xf]
    %v347 = vld [vmem:[%s5 + $0x14] sm:$0xf]
    %v348 = vld [vmem:[%s5 + $0x18] sm:$0xf]
    %v349 = vld [vmem:[%s5 + $0x1c] sm:$0xf]
    %v350 = vld [vmem:[%s5 + $0x20] sm:$0xf]
    %v351 = vld [vmem:[%s5 + $0x24] sm:$0xf]
    %v352 = vld [vmem:[%s5 + $0x28] sm:$0xf]
    %v353 = vld [vmem:[%s5 + $0x2c] sm:$0xf]
    %v354 = vld [vmem:[%s5 + $0x30] sm:$0xf]
    %v355 = vld [vmem:[%s5 + $0x34] sm:$0xf]
    %v356 = vld [vmem:[%s5 + $0x38] sm:$0xf]
    %v357 = vld [vmem:[%s5 + $0x3c] sm:$0xf]
    %v358 = vld [vmem:[%s6] sm:$0x1]
    %v360 = vlaneseq
    %v361 = vshrl.u32 %v360, 7
    %v362 = vsub.s32 0, %v361
    %v363 = vrot.slane %v358, %v362
    %v381 = vunpack.c.l.b16 %v342
    %v382 = vunpack.c.l.b16 %v343
    %v383 = vunpack.c.l.b16 %v344
    %v384 = vunpack.c.l.b16 %v345
    %v385 = vunpack.c.l.b16 %v346
    %v386 = vunpack.c.l.b16 %v347
    %v387 = vunpack.c.l.b16 %v348
    %v388 = vunpack.c.l.b16 %v349
    %v389 = vunpack.c.l.b16 %v350
    %v390 = vunpack.c.l.b16 %v351
    %v391 = vunpack.c.l.b16 %v352
    %v392 = vunpack.c.l.b16 %v353
    %v393 = vunpack.c.l.b16 %v354
    %v394 = vunpack.c.l.b16 %v355
    %v395 = vunpack.c.l.b16 %v356
    %v396 = vunpack.c.l.b16 %v357
    %v397 = vpack.c.b16 %v382, %v381
    %v398 = vpack.c.b16 %v384, %v383
    %v399 = vpack.c.b16 %v386, %v385
    %v400 = vpack.c.b16 %v388, %v387
    %v401 = vpack.c.b16 %v390, %v389
    %v402 = vpack.c.b16 %v392, %v391
    %v403 = vpack.c.b16 %v394, %v393
    %v404 = vpack.c.b16 %v396, %v395
    %413 = vmatprep.subr.bf16.mxu0 0
    %414 = vmatpush1.bf16.msra.mxu0 %v404
    %415 = vmatprep.subr.bf16.mxu0 0
    %416 = vmatpush1.bf16.msra.mxu0 %v403
    %417 = vmatprep.subr.bf16.mxu0 0
    %418 = vmatpush1.bf16.msra.mxu0 %v402
    %419 = vmatprep.subr.bf16.mxu0 0
    %420 = vmatpush1.bf16.msra.mxu0 %v401
    %421 = vmatprep.subr.bf16.mxu0 0
    %422 = vmatpush1.bf16.msra.mxu0 %v400
    %423 = vmatprep.subr.bf16.mxu0 0
    %424 = vmatpush1.bf16.msra.mxu0 %v399
    %425 = vmatprep.subr.bf16.mxu0 0
    %426 = vmatpush1.bf16.msra.mxu0 %v398
    %427 = vmatprep.subr.bf16.mxu0 0
    %428 = vmatpush1.bf16.msra.mxu0 %v397
    %429 = vmatprep.subr.bf16.mxu0 0
    %430 = vmatpush2.bf16.msra.mxu0 0
    %431 = vmatprep.subr.bf16.mxu0 0
    %432 = vmatpush2.bf16.msra.mxu0 0
    %433 = vmatprep.subr.bf16.mxu0 0
    %434 = vmatpush2.bf16.msra.mxu0 0
    %435 = vmatprep.subr.bf16.mxu0 0
    %436 = vmatpush2.bf16.msra.mxu0 0
    %437 = vmatprep.subr.bf16.mxu0 0
    %438 = vmatpush2.bf16.msra.mxu0 0
    %439 = vmatprep.subr.bf16.mxu0 0
    %440 = vmatpush2.bf16.msra.mxu0 0
    %441 = vmatprep.subr.bf16.mxu0 0
    %442 = vmatpush2.bf16.msra.mxu0 0
    %443 = vmatprep.subr.bf16.mxu0 0
    %444 = vmatpush2.bf16.msra.mxu0 0
    %445 = vmatprep.mubr.bf16.mxu0 0
    %446 = vmatmul.mubr.bf16.gmra.mxu0 %v341
    %v447 = vpop.f32.mrf.mxu0
    %v448 = vadd.f32 %v363, %v447
    %v449 = vpop.f32.mrf.mxu0
    %v450 = vpop.f32.mrf.mxu0
    %v451 = vpop.f32.mrf.mxu0
    %452 = vdwg.mxu0
    %vm453 = vcmask 64512
    %454 = vst.msk [vmem:[#allocation7] sm:$0xff] %vm453, %v448
    // Predicated region
    $region38: #{tpu_custom_call.1} parent=1 // pred_check
      _
    $region39: #{tpu_custom_call.1} parent=1 // pred_check_branch
      %456 = sbr.rel (0) target = $region41
    $region40: #{tpu_custom_call.1} parent=1 // pred_region
      %s458 = ssub.s32 128, 128
      %459 = vsyncadd [#allocation4], %s458
      %s461 = sshll.u32 [#allocation7], 4
      %s462 = int_to_ptr.vmem [resolvable:$true] %s461
      %464 = dma.vmem_to_hbm [thread:$0]  %s462, 128, %s7, [#allocation4]
    $region41: #{tpu_custom_call.1} parent=1 // pred_fallthru
      _
    // Predicated region
    $region42: #{tpu_custom_call.1} parent=1 // pred_check
      _
    $region43: #{tpu_custom_call.1} parent=1 // pred_check_branch
      %466 = sbr.rel (0) target = $region45
    $region44: #{tpu_custom_call.1} parent=1 // pred_region
      %467 = dma.done [#allocation4], 128
    $region45: #{tpu_custom_call.1} parent=1 // pred_fallthru
      _
    %468 = vsyncpa [#allocation3], 1
    %469 = vsyncpa [#allocation6], 1
    %470 = vsyncpa [#allocation4], 1

</llo_original>
